<compile_context>
chip_gen: v5e
topology: v5e:2x2
jax: 0.10.0
libtpu: 0.0.40
codegen_flags: <defaults>
</compile_context>

<pallas_src>
import functools

import jax
import jax.numpy as jnp
from jax import lax
from jax.experimental import pallas as pl
from jax.experimental.pallas import tpu as pltpu

EPS = 1e-5
VMEM_LIMIT = 64 * 1024 * 1024  # explicit scoped-VMEM cap; tiles stay far below it


def _round_up(x, m):
    return ((x + m - 1) // m) * m


def _bn_scale_shift(sum_row, sumsq_row, gamma, beta, n_rows):
    """Per-channel (1, C) scale/shift so that scale*z + shift == gamma*(z-mu)*rsqrt(var+eps)+beta."""
    inv_n = 1.0 / float(n_rows)
    mu = sum_row * inv_n
    var = sumsq_row * inv_n - mu * mu
    scale = gamma * lax.rsqrt(var + EPS)
    return scale, beta - mu * scale


# ----------------------------- kernel A -----------------------------

def _conv1_shortcut_kernel(p1_ref, psc_ref, w1_ref, wsc_ref,
                           z1_ref, zsc_ref, stats_ref):
    # bf16 operands, f32 accumulation on the MXU.  No bias adds (cancelled by BN).
    z1 = jnp.dot(p1_ref[...], w1_ref[...], preferred_element_type=jnp.float32)
    zsc = jnp.dot(psc_ref[...], wsc_ref[...], preferred_element_type=jnp.float32)
    z1_ref[...] = z1.astype(z1_ref.dtype)
    zsc_ref[...] = zsc.astype(zsc_ref.dtype)

    c = z1.shape[1]
    part = jnp.concatenate(
        [jnp.sum(z1, axis=0, keepdims=True),
         jnp.sum(z1 * z1, axis=0, keepdims=True),
         jnp.sum(zsc, axis=0, keepdims=True),
         jnp.sum(zsc * zsc, axis=0, keepdims=True),
         jnp.zeros((4, c), jnp.float32)],
        axis=0)

    @pl.when(pl.program_id(0) == 0)
    def _():
        stats_ref[...] = jnp.zeros_like(stats_ref)

    stats_ref[...] += part


# ----------------------------- kernel B -----------------------------

def _bn1_relu_conv2_kernel(z1p_ref, s1_ref, g1_ref, b1_ref, w2_ref,
                           z2_ref, stats2_ref, *, n_rows):
    _, hp, wp, c = z1p_ref.shape
    ho, wo = hp - 2, wp - 2

    # bn1 scale/shift from the whole-batch statistics produced by kernel A.
    s1 = s1_ref[...]
    scale, shift = _bn_scale_shift(s1[0:1, :], s1[1:2, :],
                                   g1_ref[...], b1_ref[...], n_rows)

    # Normalize + ReLU the zero-padded conv1 image slab, then re-zero the 1-pixel
    # border (conv2's zero padding applies to the *post* bn1+relu activation).
    z = z1p_ref[0].astype(jnp.float32)                              # (hp, wp, c)
    y = jnp.maximum(z * scale.reshape(1, 1, c) + shift.reshape(1, 1, c), 0.0)
    ri = lax.broadcasted_iota(jnp.int32, (hp, wp, c), 0)
    ci = lax.broadcasted_iota(jnp.int32, (hp, wp, c), 1)
    interior = (ri >= 1) & (ri <= ho) & (ci >= 1) & (ci <= wo)
    y = jnp.where(interior, y, 0.0)

    # conv2 (3x3 stride 1) as 9 shifted matmuls -- no im2col in HBM.
    acc = jnp.zeros((ho * wo, c), jnp.float32)
    for t in range(9):
        di, dj = t // 3, t % 3
        patch = y[di:di + ho, dj:dj + wo, :].reshape(ho * wo, c).astype(jnp.bfloat16)
        acc += jnp.dot(patch, w2_ref[t], preferred_element_type=jnp.float32)

    z2_ref[0] = acc

    part = jnp.concatenate(
        [jnp.sum(acc, axis=0, keepdims=True),
         jnp.sum(acc * acc, axis=0, keepdims=True),
         jnp.zeros((6, c), jnp.float32)],
        axis=0)

    @pl.when(pl.program_id(0) == 0)
    def _():
        stats2_ref[...] = jnp.zeros_like(stats2_ref)

    stats2_ref[...] += part


# ----------------------------- kernel C -----------------------------

def _bn2_residual_kernel(z2_ref, zsc_ref, s2_ref, ssc_ref,
                         g2_ref, b2_ref, gsc_ref, bsc_ref, o_ref, *, n_rows):
    s2 = s2_ref[...]
    ssc = ssc_ref[...]
    sc2, sh2 = _bn_scale_shift(s2[0:1, :], s2[1:2, :], g2_ref[...], b2_ref[...], n_rows)
    scs, shs = _bn_scale_shift(ssc[2:3, :], ssc[3:4, :], gsc_ref[...], bsc_ref[...], n_rows)
    y2 = z2_ref[...] * sc2 + sh2
    ysc = zsc_ref[...].astype(jnp.float32) * scs + shs
    o_ref[...] = jnp.maximum(y2 + ysc, 0.0)


# --------------------------- layout glue ----------------------------

def _im2col(x_nhwc, ksize, stride, pad):
    """Conv patches. Returns (N*Ho*Wo, ksize*ksize*C); rows are (n, ho, wo) row-major."""
    n, h, w, c = x_nhwc.shape
    xp = jnp.pad(x_nhwc, ((0, 0), (pad, pad), (pad, pad), (0, 0)))
    ho = (h + 2 * pad - ksize) // stride + 1
    wo = (w + 2 * pad - ksize) // stride + 1
    cols = []
    for ki in range(ksize):
        for kj in range(ksize):
            cols.append(xp[:, ki:ki + ho * stride:stride,
                           kj:kj + wo * stride:stride, :])
    patches = jnp.concatenate(cols, axis=-1)                    # (N, Ho, Wo, k*k*C)
    return patches.reshape(n * ho * wo, ksize * ksize * c), (n, ho, wo)


def _conv_weight_to_matmul(w_oihw):
    """(Cout, Cin, kh, kw) -> (kh*kw*Cin, Cout), matching _im2col column order."""
    co, ci, kh, kw = w_oihw.shape
    return jnp.transpose(w_oihw, (2, 3, 1, 0)).reshape(kh * kw * ci, co)


# ----------------------------- wrapper ------------------------------

def res_bottleneck_block_projection(x_nchw, params, *, tile_p=64):
    """Forward pass matching the PyTorch module (downsample=True, ReLU, training-mode BN).

    tile_p: row tile over P = N*Ho*Wo.  64 keeps the toy test on a multi-step grid;
    for production shapes raise it (~2048 on v7x's 64 MiB VMEM, ~4096 on v5e/v6e's
    128 MiB) so the double-buffered working set fills VMEM.
    """
    n, cin, h, w = x_nchw.shape
    cout = params["w1"].shape[0]
    ho = (h + 2 - 3) // 2 + 1
    wo = (w + 2 - 3) // 2 + 1
    p_rows = n * ho * wo

    cpad = _round_up(cout, 128)
    k1 = 9 * cin
    k1p = _round_up(k1, 128)
    kscp = _round_up(cin, 128)
    tile_p = max(8, (min(tile_p, _round_up(p_rows, 8)) // 8) * 8)
    p_pad = _round_up(p_rows, tile_p)

    x = jnp.transpose(x_nchw, (0, 2, 3, 1)).astype(jnp.float32)      # NHWC

    # Host-side patch extraction for conv1/shortcut (stride-2 im2col: ~2.25x read
    # amplification only; conv2's 9x im2col is eliminated inside kernel B).
    # TODO(synk): conv1/shortcut patch extraction could also move in-kernel
    # (shifted strided loads) to drop the remaining host-side im2col.
    p1, _ = _im2col(x, 3, 2, 1)                                      # (P, 9*Cin)
    p1 = jnp.pad(p1, ((0, p_pad - p_rows), (0, k1p - k1))).astype(jnp.bfloat16)
    psc = x[:, ::2, ::2, :].reshape(p_rows, cin)                     # 1x1 stride-2 rows
    psc = jnp.pad(psc, ((0, p_pad - p_rows), (0, kscp - cin))).astype(jnp.bfloat16)

    w1m = jnp.pad(_conv_weight_to_matmul(params["w1"]),
                  ((0, k1p - k1), (0, cpad - cout))).astype(jnp.bfloat16)
    wscm = jnp.pad(_conv_weight_to_matmul(params["wsc"]),
                   ((0, kscp - cin), (0, cpad - cout))).astype(jnp.bfloat16)
    w2t = jnp.transpose(params["w2"], (2, 3, 1, 0)).reshape(9, cout, cout)
    w2t = jnp.pad(w2t, ((0, 0), (0, cpad - cout), (0, cpad - cout))).astype(jnp.bfloat16)

    def chan(v):  # per-channel BN vector -> padded (1, Cpad) f32 row
        return jnp.pad(v.astype(jnp.float32).reshape(1, cout), ((0, 0), (0, cpad - cout)))

    g1, bt1 = chan(params["g1"]), chan(params["beta1"])
    g2, bt2 = chan(params["g2"]), chan(params["beta2"])
    gsc, btsc = chan(params["gsc"]), chan(params["betasc"])
    # NOTE: conv biases b1 / bsc / b2 are intentionally unused -- a bias added
    # before training-mode BatchNorm is exactly cancelled by the mean subtraction.

    # ---- kernel A: conv1 + shortcut matmuls, BN statistics accumulation ----
    z1, zsc, stats_a = pl.pallas_call(
        _conv1_shortcut_kernel,
        out_shape=(jax.ShapeDtypeStruct((p_pad, cpad), jnp.bfloat16),
                   jax.ShapeDtypeStruct((p_pad, cpad), jnp.bfloat16),
                   jax.ShapeDtypeStruct((8, cpad), jnp.float32)),
        grid=(p_pad // tile_p,),
        in_specs=[pl.BlockSpec((tile_p, k1p), lambda i: (i, 0)),
                  pl.BlockSpec((tile_p, kscp), lambda i: (i, 0)),
                  pl.BlockSpec((k1p, cpad), lambda i: (0, 0)),
                  pl.BlockSpec((kscp, cpad), lambda i: (0, 0))],
        out_specs=(pl.BlockSpec((tile_p, cpad), lambda i: (i, 0)),
                   pl.BlockSpec((tile_p, cpad), lambda i: (i, 0)),
                   pl.BlockSpec((8, cpad), lambda i: (0, 0))),
        compiler_params=pltpu.CompilerParams(
            dimension_semantics=("arbitrary",),
            vmem_limit_bytes=VMEM_LIMIT),
    )(p1, psc, w1m, wscm)

    # ---- kernel B: bn1 + relu + conv2 (9 shifted matmuls) + bn2 statistics ----
    z1_img = z1[:p_rows].reshape(n, ho, wo, cpad)
    z1_padded = jnp.pad(z1_img, ((0, 0), (1, 1), (1, 1), (0, 0)))    # conv2 zero pad
    hp, wp = ho + 2, wo + 2

    z2, stats_b = pl.pallas_call(
        functools.partial(_bn1_relu_conv2_kernel, n_rows=p_rows),
        out_shape=(jax.ShapeDtypeStruct((n, ho * wo, cpad), jnp.float32),
                   jax.ShapeDtypeStruct((8, cpad), jnp.float32)),
        grid=(n,),
        in_specs=[pl.BlockSpec((1, hp, wp, cpad), lambda b: (b, 0, 0, 0)),
                  pl.BlockSpec((8, cpad), lambda b: (0, 0)),
                  pl.BlockSpec((1, cpad), lambda b: (0, 0)),
                  pl.BlockSpec((1, cpad), lambda b: (0, 0)),
                  pl.BlockSpec((9, cpad, cpad), lambda b: (0, 0, 0))],
        out_specs=(pl.BlockSpec((1, ho * wo, cpad), lambda b: (b, 0, 0)),
                   pl.BlockSpec((8, cpad), lambda b: (0, 0))),
        compiler_params=pltpu.CompilerParams(
            dimension_semantics=("arbitrary",),
            vmem_limit_bytes=VMEM_LIMIT),
    )(z1_padded, stats_a, g1, bt1, w2t)

    # ---- kernel C: bn2 + bn_sc + residual add + relu (lane-dense row tiles) ----
    z2_rows = jnp.pad(z2.reshape(p_rows, cpad), ((0, p_pad - p_rows), (0, 0)))
    out_rows = pl.pallas_call(
        functools.partial(_bn2_residual_kernel, n_rows=p_rows),
        out_shape=jax.ShapeDtypeStruct((p_pad, cpad), jnp.float32),
        grid=(p_pad // tile_p,),
        in_specs=[pl.BlockSpec((tile_p, cpad), lambda i: (i, 0)),
                  pl.BlockSpec((tile_p, cpad), lambda i: (i, 0)),
                  pl.BlockSpec((8, cpad), lambda i: (0, 0)),
                  pl.BlockSpec((8, cpad), lambda i: (0, 0)),
                  pl.BlockSpec((1, cpad), lambda i: (0, 0)),
                  pl.BlockSpec((1, cpad), lambda i: (0, 0)),
                  pl.BlockSpec((1, cpad), lambda i: (0, 0)),
                  pl.BlockSpec((1, cpad), lambda i: (0, 0))],
        out_specs=pl.BlockSpec((tile_p, cpad), lambda i: (i, 0)),
        compiler_params=pltpu.CompilerParams(
            dimension_semantics=("parallel",),
            vmem_limit_bytes=VMEM_LIMIT),
    )(z2_rows, zsc, stats_b, stats_a, g2, bt2, gsc, btsc)

    out = out_rows[:p_rows].reshape(n, ho, wo, cpad)[..., :cout]
    return jnp.transpose(out, (0, 3, 1, 2))                          # NCHW


# ------------------------- pure-JAX reference -------------------------

def _ref_bn_train(z_nchw, gamma, beta):
    mu = jnp.mean(z_nchw, axis=(0, 2, 3), keepdims=True)
    var = jnp.mean((z_nchw - mu) ** 2, axis=(0, 2, 3), keepdims=True)
    return ((z_nchw - mu) * lax.rsqrt(var + EPS) * gamma.reshape(1, -1, 1, 1)
            + beta.reshape(1, -1, 1, 1))


def _ref_conv(x, w, b, stride, pad):
    y = lax.conv_general_dilated(
        x, w, (stride, stride), [(pad, pad), (pad, pad)],
        dimension_numbers=("NCHW", "OIHW", "NCHW"),
        precision=lax.Precision.HIGHEST)
    return y + b.reshape(1, -1, 1, 1)


def ref_forward(x, p):
    sc = _ref_bn_train(_ref_conv(x, p["wsc"], p["bsc"], 2, 0), p["gsc"], p["betasc"])
    y = jax.nn.relu(_ref_bn_train(_ref_conv(x, p["w1"], p["b1"], 2, 1), p["g1"], p["beta1"]))
    y = _ref_bn_train(_ref_conv(y, p["w2"], p["b2"], 1, 1), p["g2"], p["beta2"])
    return jax.nn.relu(y + sc)


# ------------------------------ main ------------------------------

if __name__ == "__main__":
    N, Cin, H, W = 2, 4, 16, 16
    Cout = 8  # downsample=True -> stride 2 -> output spatial 8x8

    key = jax.random.PRNGKey(0)
    ks = jax.random.split(key, 14)
    x = jax.random.normal(ks[0], (N, Cin, H, W), jnp.float32)

    params = {
        # conv1: 3x3 stride 2
        "w1": 0.1 * jax.random.normal(ks[1], (Cout, Cin, 3, 3), jnp.float32),
        "b1": 0.1 * jax.random.normal(ks[2], (Cout,), jnp.float32),
        "g1": 1.0 + 0.1 * jax.random.normal(ks[3], (Cout,), jnp.float32),
        "beta1": 0.1 * jax.random.normal(ks[4], (Cout,), jnp.float32),
        # conv2: 3x3 stride 1
        "w2": 0.1 * jax.random.normal(ks[5], (Cout, Cout, 3, 3), jnp.float32),
        "b2": 0.1 * jax.random.normal(ks[6], (Cout,), jnp.float32),
        "g2": 1.0 + 0.1 * jax.random.normal(ks[7], (Cout,), jnp.float32),
        "beta2": 0.1 * jax.random.normal(ks[8], (Cout,), jnp.float32),
        # shortcut: 1x1 stride 2 conv + BN
        "wsc": 0.1 * jax.random.normal(ks[9], (Cout, Cin, 1, 1), jnp.float32),
        "bsc": 0.1 * jax.random.normal(ks[10], (Cout,), jnp.float32),
        "gsc": 1.0 + 0.1 * jax.random.normal(ks[11], (Cout,), jnp.float32),
        "betasc": 0.1 * jax.random.normal(ks[12], (Cout,), jnp.float32),
    }

    out = jax.block_until_ready(res_bottleneck_block_projection(x, params))
    ref = jax.block_until_ready(ref_forward(x, params))

    assert out.shape == (N, Cout, H // 2, W // 2), out.shape
    # bf16 MXU operands (f32 accumulation) through two chained convs + BN vs an
    # f32/HIGHEST reference -> agreement at the ~1e-2 level.
    assert jnp.allclose(out, ref, atol=3e-2, rtol=3e-2), float(jnp.max(jnp.abs(out - ref)))

    print("KERNEL_OK")
</pallas_src>

<mosaic_0001>
module attributes {stable_mosaic.version = 11 : i64} {
  func.func @_conv1_shortcut_kernel(%arg0: i32, %arg1: memref<64x128xbf16, #tpu.memory_space<vmem>>, %arg2: memref<64x128xbf16, #tpu.memory_space<vmem>>, %arg3: memref<128x128xbf16, #tpu.memory_space<vmem>>, %arg4: memref<128x128xbf16, #tpu.memory_space<vmem>>, %arg5: memref<64x128xbf16, #tpu.memory_space<vmem>>, %arg6: memref<64x128xbf16, #tpu.memory_space<vmem>>, %arg7: memref<8x128xf32, #tpu.memory_space<vmem>>) attributes {dimension_semantics = [#tpu.dimension_semantics<arbitrary>], iteration_bounds = array<i64: 2>, scalar_prefetch = 0 : i64, scratch_operands = 0 : i64, tpu.core_type = #tpu.core_type<tc>, window_params = [{transform_indices = @transform_0, window_bounds = array<i64: 64, 128>}, {transform_indices = @transform_1, window_bounds = array<i64: 64, 128>}, {pipeline_mode = #tpu.pipeline_mode<synchronous>, transform_indices = @transform_2, window_bounds = array<i64: 128, 128>}, {pipeline_mode = #tpu.pipeline_mode<synchronous>, transform_indices = @transform_3, window_bounds = array<i64: 128, 128>}, {transform_indices = @transform_4, window_bounds = array<i64: 64, 128>}, {transform_indices = @transform_5, window_bounds = array<i64: 64, 128>}, {pipeline_mode = #tpu.pipeline_mode<synchronous>, transform_indices = @transform_6, window_bounds = array<i64: 8, 128>}]} {
    %c0 = arith.constant 0 : index
    %c0_0 = arith.constant 0 : index
    %0 = vector.load %arg1[%c0, %c0_0] : memref<64x128xbf16, #tpu.memory_space<vmem>>, vector<64x128xbf16>
    %c0_1 = arith.constant 0 : index
    %c0_2 = arith.constant 0 : index
    %1 = vector.load %arg3[%c0_1, %c0_2] : memref<128x128xbf16, #tpu.memory_space<vmem>>, vector<128x128xbf16>
    %cst = arith.constant dense<0.000000e+00> : vector<64x128xf32>
    %2 = tpu.matmul %0, %1, %cst {dimension_numbers = #tpu.dot_dimension_numbers<[1], [0], [0], [1], [0, 0, 1, 1], [], []>} : vector<64x128xbf16>, vector<128x128xbf16>, vector<64x128xf32> -> vector<64x128xf32>
    %c0_3 = arith.constant 0 : index
    %c0_4 = arith.constant 0 : index
    %3 = vector.load %arg2[%c0_3, %c0_4] : memref<64x128xbf16, #tpu.memory_space<vmem>>, vector<64x128xbf16>
    %c0_5 = arith.constant 0 : index
    %c0_6 = arith.constant 0 : index
    %4 = vector.load %arg4[%c0_5, %c0_6] : memref<128x128xbf16, #tpu.memory_space<vmem>>, vector<128x128xbf16>
    %cst_7 = arith.constant dense<0.000000e+00> : vector<64x128xf32>
    %5 = tpu.matmul %3, %4, %cst_7 {dimension_numbers = #tpu.dot_dimension_numbers<[1], [0], [0], [1], [0, 0, 1, 1], [], []>} : vector<64x128xbf16>, vector<128x128xbf16>, vector<64x128xf32> -> vector<64x128xf32>
    %6 = arith.truncf %2 : vector<64x128xf32> to vector<64x128xbf16>
    %c0_8 = arith.constant 0 : index
    %c0_9 = arith.constant 0 : index
    %7 = vector.load %arg5[%c0_8, %c0_9] : memref<64x128xbf16, #tpu.memory_space<vmem>>, vector<64x128xbf16>
    tpu.vector_store %arg5[%c0_8, %c0_9], %6 {strides = array<i32>} : memref<64x128xbf16, #tpu.memory_space<vmem>>, vector<64x128xbf16>,
    %8 = arith.truncf %5 : vector<64x128xf32> to vector<64x128xbf16>
    %c0_10 = arith.constant 0 : index
    %c0_11 = arith.constant 0 : index
    %9 = vector.load %arg6[%c0_10, %c0_11] : memref<64x128xbf16, #tpu.memory_space<vmem>>, vector<64x128xbf16>
    tpu.vector_store %arg6[%c0_10, %c0_11], %8 {strides = array<i32>} : memref<64x128xbf16, #tpu.memory_space<vmem>>, vector<64x128xbf16>,
    %cst_12 = arith.constant dense<0.000000e+00> : vector<128xf32>
    %10 = vector.multi_reduction <add>, %2, %cst_12 [0] : vector<64x128xf32> to vector<128xf32>
    %11 = vector.shape_cast %10 : vector<128xf32> to vector<1x128xf32>
    %12 = arith.mulf %2, %2 : vector<64x128xf32>
    %cst_13 = arith.constant dense<0.000000e+00> : vector<128xf32>
    %13 = vector.multi_reduction <add>, %12, %cst_13 [0] : vector<64x128xf32> to vector<128xf32>
    %14 = vector.shape_cast %13 : vector<128xf32> to vector<1x128xf32>
    %cst_14 = arith.constant dense<0.000000e+00> : vector<128xf32>
    %15 = vector.multi_reduction <add>, %5, %cst_14 [0] : vector<64x128xf32> to vector<128xf32>
    %16 = vector.shape_cast %15 : vector<128xf32> to vector<1x128xf32>
    %17 = arith.mulf %5, %5 : vector<64x128xf32>
    %cst_15 = arith.constant dense<0.000000e+00> : vector<128xf32>
    %18 = vector.multi_reduction <add>, %17, %cst_15 [0] : vector<64x128xf32> to vector<128xf32>
    %19 = vector.shape_cast %18 : vector<128xf32> to vector<1x128xf32>
    %cst_16 = arith.constant 0.000000e+00 : f32
    %20 = vector.broadcast %cst_16 : f32 to vector<4x128xf32>
    %21 = tpu.concatenate %11, %14, %16, %19, %20 in 0 : vector<1x128xf32>, vector<1x128xf32>, vector<1x128xf32>, vector<1x128xf32>, vector<4x128xf32> -> vector<8x128xf32>
    %c0_i32 = arith.constant 0 : i32
    %22 = arith.cmpi eq, %arg0, %c0_i32 : i32
    %23 = arith.extui %22 : i1 to i32
    %c0_i32_17 = arith.constant 0 : i32
    %24 = arith.cmpi ne, %23, %c0_i32_17 : i32
    scf.if %24 {
      %cst_22 = arith.constant 0.000000e+00 : f32
      %28 = vector.broadcast %cst_22 : f32 to vector<8x128xf32>
      %c0_23 = arith.constant 0 : index
      %c0_24 = arith.constant 0 : index
      %29 = vector.load %arg7[%c0_23, %c0_24] : memref<8x128xf32, #tpu.memory_space<vmem>>, vector<8x128xf32>
      tpu.vector_store %arg7[%c0_23, %c0_24], %28 {strides = array<i32>} : memref<8x128xf32, #tpu.memory_space<vmem>>, vector<8x128xf32>,
    } else {
    }
    %c0_18 = arith.constant 0 : index
    %c0_19 = arith.constant 0 : index
    %25 = vector.load %arg7[%c0_18, %c0_19] : memref<8x128xf32, #tpu.memory_space<vmem>>, vector<8x128xf32>
    %26 = arith.addf %25, %21 : vector<8x128xf32>
    %c0_20 = arith.constant 0 : index
    %c0_21 = arith.constant 0 : index
    %27 = vector.load %arg7[%c0_20, %c0_21] : memref<8x128xf32, #tpu.memory_space<vmem>>, vector<8x128xf32>
    tpu.vector_store %arg7[%c0_20, %c0_21], %26 {strides = array<i32>} : memref<8x128xf32, #tpu.memory_space<vmem>>, vector<8x128xf32>,
    return
  }
  func.func @transform_0(%arg0: i32) -> (i32, i32) {
    %c0_i32 = arith.constant 0 : i32
    %c0_i32_0 = arith.constant 0 : i32
    return %arg0, %c0_i32 : i32, i32
  }
  func.func @transform_1(%arg0: i32) -> (i32, i32) {
    %c0_i32 = arith.constant 0 : i32
    %c0_i32_0 = arith.constant 0 : i32
    return %arg0, %c0_i32 : i32, i32
  }
  func.func @transform_2(%arg0: i32) -> (i32, i32) {
    %c0_i32 = arith.constant 0 : i32
    %c0_i32_0 = arith.constant 0 : i32
    %c0_i32_1 = arith.constant 0 : i32
    return %c0_i32, %c0_i32_0 : i32, i32
  }
  func.func @transform_3(%arg0: i32) -> (i32, i32) {
    %c0_i32 = arith.constant 0 : i32
    %c0_i32_0 = arith.constant 0 : i32
    %c0_i32_1 = arith.constant 0 : i32
    return %c0_i32, %c0_i32_0 : i32, i32
  }
  func.func @transform_4(%arg0: i32) -> (i32, i32) {
    %c0_i32 = arith.constant 0 : i32
    %c0_i32_0 = arith.constant 0 : i32
    return %arg0, %c0_i32 : i32, i32
  }
  func.func @transform_5(%arg0: i32) -> (i32, i32) {
    %c0_i32 = arith.constant 0 : i32
    %c0_i32_0 = arith.constant 0 : i32
    return %arg0, %c0_i32 : i32, i32
  }
  func.func @transform_6(%arg0: i32) -> (i32, i32) {
    %c0_i32 = arith.constant 0 : i32
    %c0_i32_0 = arith.constant 0 : i32
    %c0_i32_1 = arith.constant 0 : i32
    return %c0_i32, %c0_i32_0 : i32, i32
  }
}

</mosaic_0001>

<llo_original>
// kernel: tpu_custom_call.1
$region0: #{tpu_custom_call.1}
  #allocation0 [shape = 'u32[]', space=smem, size = 0x4, offset = 0x4, fixed_abs, tag = 'smem constant byte address 0x4 - core index']
  #allocation1 [shape = 'u32[72,128]{1,0:T(1,128)}', space=vmem, size = 0x9000, scoped, tag = 'internal scratch']
  %s0 = inlined_call_operand.hbm [shape: bf16[128,128], index: 0, kind: input, shape index: {}]
  %s1 = inlined_call_operand.hbm [shape: bf16[128,128], index: 1, kind: input, shape index: {}]
  %s2 = inlined_call_operand.hbm [shape: bf16[128,128], index: 2, kind: input, shape index: {}]
  %s3 = inlined_call_operand.hbm [shape: bf16[128,128], index: 3, kind: input, shape index: {}]
  %s4 = inlined_call_operand.hbm [shape: bf16[128,128], index: 4, kind: output, shape index: {0}]
  %s5 = inlined_call_operand.hbm [shape: bf16[128,128], index: 5, kind: output, shape index: {1}]
  %s6 = inlined_call_operand.hbm [shape: f32[8,128], index: 6, kind: output, shape index: {2}]
  %7 = xla_tuple %s4, %s5, %s6
  %s8 = sld [smem:[#allocation0]]
  $region85: #{tpu_custom_call.1} parent=0
    _
  %s10 = ssub.s32 1, %s8
  %s11 = scalar_select 0, %s10, %s8
  $region1: #{tpu_custom_call.1} parent=0
    #allocation2 [shape = 'u8[32768]{0}', space=vmem, size = 0x8000, scoped, tag = 'input window, operand 0']
    #allocation3 [shape = 's32[2]{0}', space=sflag, size = 0x8, scoped, tag = 'scoped memory for tpu_custom_call.1']
    #allocation4 [shape = 's32[2]{0}', space=sflag, size = 0x8, scoped, tag = 'scoped memory for tpu_custom_call.1']
    #allocation5 [shape = 'u8[32768]{0}', space=vmem, size = 0x8000, scoped, tag = 'input window, operand 1']
    #allocation6 [shape = 's32[2]{0}', space=sflag, size = 0x8, scoped, tag = 'scoped memory for tpu_custom_call.1']
    #allocation7 [shape = 'u8[32768]{0}', space=vmem, size = 0x8000, scoped, tag = 'input window, operand 2, single buffered']
    #allocation8 [shape = 'u8[32768]{0}', space=vmem, size = 0x8000, scoped, tag = 'input window, operand 3, single buffered']
    #allocation9 [shape = 's32[1]{0}', space=sflag, size = 0x4, scoped, tag = 'scoped memory for tpu_custom_call.1']
    #allocation10 [shape = 'u8[32768]{0}', space=vmem, size = 0x8000, scoped, tag = 'output window, operand 0']
    #allocation11 [shape = 'u8[32768]{0}', space=vmem, size = 0x8000, scoped, tag = 'output window, operand 1']
    #allocation12 [shape = 's32[2]{0}', space=sflag, size = 0x8, scoped, tag = 'scoped memory for tpu_custom_call.1']
    #allocation13 [shape = 'u8[4096]{0}', space=vmem, size = 0x1000, scoped, tag = 'output window, operand 2, single buffered']
    %12 = vsyncpa [#allocation3], 0
    %s13 = scalar_lea.sflag [#allocation3], 1
    %14 = vsyncpa %s13, 0
    %15 = vsyncpa [#allocation6], 0
    %s16 = scalar_lea.sflag [#allocation6], 1
    %17 = vsyncpa %s16, 0
    %18 = vsyncpa [#allocation9], 0
    %19 = vsyncpa [#allocation4], 0
    %s20 = scalar_lea.sflag [#allocation4], 1
    %21 = vsyncpa %s20, 0
    %22 = vsyncpa [#allocation12], 0
    %s23 = scalar_lea.sflag [#allocation12], 1
    %24 = vsyncpa %s23, 0
    loop: start=0, step=1, limit=4
    $region2: #{tpu_custom_call.1} parent=1 // loop_pre_header
      _
    $region3: #{tpu_custom_call.1} parent=1 // loop_header
      %s26 = sphi 0, %s30
      %p27 = scmp.ge.s32.totalorder %s26, 4
      %s36 = sphi 0, %s38
      %s39 = sphi 0, %s36
      %s40 = sphi 0, %s39
      %s56 = sphi 0, %s40
      %s62 = sphi 0, %s64
      %s65 = sphi 0, %s62
      %s66 = sphi 0, %s65
      %s82 = sphi 0, %s66
      %s86 = sphi 0, %s86
      %s88 = sphi 0, %s86
      %s89 = sphi 0, %s88
      %s103 = sphi 0, %s89
      %s107 = sphi 0, %s107
      %s109 = sphi 0, %s107
      %s110 = sphi 0, %s109
      %s124 = sphi 0, %s110
      %s130 = sphi 0, %s132
      %s133 = sphi 0, %s130
      %s134 = sphi 0, %s133
      %s150 = sphi 0, %s134
      %s156 = sphi 0, %s158
      %s159 = sphi 0, %s156
      %s160 = sphi 0, %s159
      %s176 = sphi 0, %s160
      %s180 = sphi 0, %s180
      %s182 = sphi 0, %s180
      %s183 = sphi 0, %s182
      %s197 = sphi 0, %s183
    $region4: #{tpu_custom_call.1} parent=1 // loop_header_branch
      %29 = sbr.rel (%p27) target = $region8
    $region5: #{tpu_custom_call.1} parent=1 // loop_body
      %s31 = ssub.s32 %s26, 1
      %s32 = ssub.s32 %s26, 2
      %s33 = sadd.s32 %s26, 1
      %s34 = ssub.s32 %s26, %s33
      %p35 = scmp.eq.s32.totalorder %s34, 0
      %s37 = sadd.s32 %s36, 1
      %s38 = scalar_select %p35, %s36, %s37
      %p41 = pneg %p35
      %p42 = scmp.eq.s32.totalorder %s26, 1
      %p43 = por %p41, %p42
      %p44 = scmp.ne.s32.totalorder %s36, %s39
      %p45 = scmp.eq.s32.totalorder %s26, 0
      %p46 = por %p44, %p45
      %p47 = scmp.ne.s32.totalorder %s36, %s39
      %p48 = scmp.eq.s32.totalorder %s31, 1
      %p49 = por %p47, %p48
      %p50 = scmp.ne.s32.totalorder %s39, %s40
      %p51 = scmp.eq.s32.totalorder %s31, 0
      %p52 = por %p50, %p51
      %p53 = scmp.ne.s32.totalorder %s39, %s40
      %p54 = scmp.eq.s32.totalorder %s32, 1
      %p55 = por %p53, %p54
      %p57 = scmp.ne.s32.totalorder %s40, %s56
      %p58 = scmp.eq.s32.totalorder %s32, 0
      %p59 = por %p57, %p58
      %s60 = ssub.s32 %s26, %s33
      %p61 = scmp.eq.s32.totalorder %s60, 0
      %s63 = sadd.s32 %s62, 1
      %s64 = scalar_select %p61, %s62, %s63
      %p67 = pneg %p61
      %p68 = scmp.eq.s32.totalorder %s26, 1
      %p69 = por %p67, %p68
      %p70 = scmp.ne.s32.totalorder %s62, %s65
      %p71 = scmp.eq.s32.totalorder %s26, 0
      %p72 = por %p70, %p71
      %p73 = scmp.ne.s32.totalorder %s62, %s65
      %p74 = scmp.eq.s32.totalorder %s31, 1
      %p75 = por %p73, %p74
      %p76 = scmp.ne.s32.totalorder %s65, %s66
      %p77 = scmp.eq.s32.totalorder %s31, 0
      %p78 = por %p76, %p77
      %p79 = scmp.ne.s32.totalorder %s65, %s66
      %p80 = scmp.eq.s32.totalorder %s32, 1
      %p81 = por %p79, %p80
      %p83 = scmp.ne.s32.totalorder %s66, %s82
      %p84 = scmp.eq.s32.totalorder %s32, 0
      %p85 = por %p83, %p84
      %s87 = sadd.s32 %s86, 1
      %p90 = scmp.eq.s32.totalorder %s26, 1
      %p91 = scmp.ne.s32.totalorder %s86, %s88
      %p92 = scmp.eq.s32.totalorder %s26, 0
      %p93 = por %p91, %p92
      %p94 = scmp.ne.s32.totalorder %s86, %s88
      %p95 = scmp.eq.s32.totalorder %s31, 1
      %p96 = por %p94, %p95
      %p97 = scmp.ne.s32.totalorder %s88, %s89
      %p98 = scmp.eq.s32.totalorder %s31, 0
      %p99 = por %p97, %p98
      %p100 = scmp.ne.s32.totalorder %s88, %s89
      %p101 = scmp.eq.s32.totalorder %s32, 1
      %p102 = por %p100, %p101
      %p104 = scmp.ne.s32.totalorder %s89, %s103
      %p105 = scmp.eq.s32.totalorder %s32, 0
      %p106 = por %p104, %p105
      %s108 = sadd.s32 %s107, 1
      %p111 = scmp.eq.s32.totalorder %s26, 1
      %p112 = scmp.ne.s32.totalorder %s107, %s109
      %p113 = scmp.eq.s32.totalorder %s26, 0
      %p114 = por %p112, %p113
      %p115 = scmp.ne.s32.totalorder %s107, %s109
      %p116 = scmp.eq.s32.totalorder %s31, 1
      %p117 = por %p115, %p116
      %p118 = scmp.ne.s32.totalorder %s109, %s110
      %p119 = scmp.eq.s32.totalorder %s31, 0
      %p120 = por %p118, %p119
      %p121 = scmp.ne.s32.totalorder %s109, %s110
      %p122 = scmp.eq.s32.totalorder %s32, 1
      %p123 = por %p121, %p122
      %p125 = scmp.ne.s32.totalorder %s110, %s124
      %p126 = scmp.eq.s32.totalorder %s32, 0
      %p127 = por %p125, %p126
      %s128 = ssub.s32 %s26, %s33
      %p129 = scmp.eq.s32.totalorder %s128, 0
      %s131 = sadd.s32 %s130, 1
      %s132 = scalar_select %p129, %s130, %s131
      %p135 = pneg %p129
      %p136 = scmp.eq.s32.totalorder %s26, 1
      %p137 = por %p135, %p136
      %p138 = scmp.ne.s32.totalorder %s130, %s133
      %p139 = scmp.eq.s32.totalorder %s26, 0
      %p140 = por %p138, %p139
      %p141 = scmp.ne.s32.totalorder %s130, %s133
      %p142 = scmp.eq.s32.totalorder %s31, 1
      %p143 = por %p141, %p142
      %p144 = scmp.ne.s32.totalorder %s133, %s134
      %p145 = scmp.eq.s32.totalorder %s31, 0
      %p146 = por %p144, %p145
      %p147 = scmp.ne.s32.totalorder %s133, %s134
      %p148 = scmp.eq.s32.totalorder %s32, 1
      %p149 = por %p147, %p148
      %p151 = scmp.ne.s32.totalorder %s134, %s150
      %p152 = scmp.eq.s32.totalorder %s32, 0
      %p153 = por %p151, %p152
      %s154 = ssub.s32 %s26, %s33
      %p155 = scmp.eq.s32.totalorder %s154, 0
      %s157 = sadd.s32 %s156, 1
      %s158 = scalar_select %p155, %s156, %s157
      %p161 = pneg %p155
      %p162 = scmp.eq.s32.totalorder %s26, 1
      %p163 = por %p161, %p162
      %p164 = scmp.ne.s32.totalorder %s156, %s159
      %p165 = scmp.eq.s32.totalorder %s26, 0
      %p166 = por %p164, %p165
      %p167 = scmp.ne.s32.totalorder %s156, %s159
      %p168 = scmp.eq.s32.totalorder %s31, 1
      %p169 = por %p167, %p168
      %p170 = scmp.ne.s32.totalorder %s159, %s160
      %p171 = scmp.eq.s32.totalorder %s31, 0
      %p172 = por %p170, %p171
      %p173 = scmp.ne.s32.totalorder %s159, %s160
      %p174 = scmp.eq.s32.totalorder %s32, 1
      %p175 = por %p173, %p174
      %p177 = scmp.ne.s32.totalorder %s160, %s176
      %p178 = scmp.eq.s32.totalorder %s32, 0
      %p179 = por %p177, %p178
      %s181 = sadd.s32 %s180, 1
      %p184 = scmp.eq.s32.totalorder %s26, 1
      %p185 = scmp.ne.s32.totalorder %s180, %s182
      %p186 = scmp.eq.s32.totalorder %s26, 0
      %p187 = por %p185, %p186
      %p188 = scmp.ne.s32.totalorder %s180, %s182
      %p189 = scmp.eq.s32.totalorder %s31, 1
      %p190 = por %p188, %p189
      %p191 = scmp.ne.s32.totalorder %s182, %s183
      %p192 = scmp.eq.s32.totalorder %s31, 0
      %p193 = por %p191, %p192
      %p194 = scmp.ne.s32.totalorder %s182, %s183
      %p195 = scmp.eq.s32.totalorder %s32, 1
      %p196 = por %p194, %p195
      %p198 = scmp.ne.s32.totalorder %s183, %s197
      %p199 = scmp.eq.s32.totalorder %s32, 0
      %p200 = por %p198, %p199
      %p201 = scmp.le.s32.totalorder 1, %s26
      %p202 = scmp.lt.s32.totalorder %s26, 3
      %p203 = pnand %p201, %p202
      %p204 = pneg %p203
      // Predicated region
      $region9: #{tpu_custom_call.1} parent=5 // pred_check
        _
      $region10: #{tpu_custom_call.1} parent=5 // pred_check_branch
        %206 = sbr.rel (%p203) target = $region12
      $region11: #{tpu_custom_call.1} parent=5 // pred_region
        %s207 = ssub.s32 %s26, 1
        // Predicated region
        $region13: #{tpu_custom_call.1} parent=11 // pred_check
          %p208 = pneg %p99
        $region14: #{tpu_custom_call.1} parent=11 // pred_check_branch
          %210 = sbr.rel (%p208) target = $region16
        $region15: #{tpu_custom_call.1} parent=11 // pred_region
          %212 = vsyncadd [#allocation6], 0
          %s213 = sshll.u32 %s2, 4
          %s214 = int_to_ptr.hbm [resolvable:$true] %s213
          %s215 = sshll.u32 [#allocation7], 4
          %s216 = int_to_ptr.vmem [resolvable:$true] %s215
          %221 = dma.hbm_to_vmem [thread:$0]  %s214, 1024, %s216, [#allocation6], 64, 64, 4
        $region16: #{tpu_custom_call.1} parent=11 // pred_fallthru
          _
        // Predicated region
        $region17: #{tpu_custom_call.1} parent=11 // pred_check
          %p222 = pneg %p120
        $region18: #{tpu_custom_call.1} parent=11 // pred_check_branch
          %224 = sbr.rel (%p222) target = $region20
        $region19: #{tpu_custom_call.1} parent=11 // pred_region
          %226 = vsyncadd [#allocation9], 0
          %s227 = sshll.u32 %s3, 4
          %s228 = int_to_ptr.hbm [resolvable:$true] %s227
          %s229 = sshll.u32 [#allocation8], 4
          %s230 = int_to_ptr.vmem [resolvable:$true] %s229
          %235 = dma.hbm_to_vmem [thread:$0]  %s228, 1024, %s230, [#allocation9], 64, 64, 4
        $region20: #{tpu_custom_call.1} parent=11 // pred_fallthru
          _
      $region12: #{tpu_custom_call.1} parent=5 // pred_fallthru
        _
      %p236 = scmp.lt.s32.totalorder %s26, 2
      // Predicated region
      $region21: #{tpu_custom_call.1} parent=5 // pred_check
        %p237 = pneg %p236
      $region22: #{tpu_custom_call.1} parent=5 // pred_check_branch
        %239 = sbr.rel (%p237) target = $region24
      $region23: #{tpu_custom_call.1} parent=5 // pred_region
        // Predicated region
        $region25: #{tpu_custom_call.1} parent=23 // pred_check
          %p240 = pneg %p46
        $region26: #{tpu_custom_call.1} parent=23 // pred_check_branch
          %242 = sbr.rel (%p240) target = $region28
        $region27: #{tpu_custom_call.1} parent=23 // pred_region
          %s243 = sand.u32 %s36, 1
          %s244 = scalar_lea.sflag [#allocation3], %s243
          %s245 = sand.u32 %s36, 1
          %s246 = smul.addr %s245, 32
          %s247 = scalar_lea.vmem [#allocation2], %s246
          %s248 = smul.u32 8, %s26
          %250 = vsyncadd %s244, 0
          %s251 = smul.addr %s248, 4
          %s252 = scalar_lea.hbm %s0, %s251
          %s253 = sshll.u32 %s252, 4
          %s254 = int_to_ptr.hbm [resolvable:$true] %s253
          %s255 = sshll.u32 %s247, 4
          %s256 = int_to_ptr.vmem [resolvable:$true] %s255
          %261 = dma.hbm_to_vmem [thread:$0]  %s254, 512, %s256, %s244, 64, 64, 4
        $region28: #{tpu_custom_call.1} parent=23 // pred_fallthru
          _
        // Predicated region
        $region29: #{tpu_custom_call.1} parent=23 // pred_check
          %p262 = pneg %p72
        $region30: #{tpu_custom_call.1} parent=23 // pred_check_branch
          %264 = sbr.rel (%p262) target = $region32
        $region31: #{tpu_custom_call.1} parent=23 // pred_region
          %s265 = sand.u32 %s26, 1
          %s266 = scalar_lea.sflag [#allocation6], %s265
          %s267 = sand.u32 %s62, 1
          %s268 = smul.addr %s267, 32
          %s269 = scalar_lea.vmem [#allocation5], %s268
          %s270 = smul.u32 8, %s26
          %272 = vsyncadd %s266, 0
          %s273 = smul.addr %s270, 4
          %s274 = scalar_lea.hbm %s1, %s273
          %s275 = sshll.u32 %s274, 4
          %s276 = int_to_ptr.hbm [resolvable:$true] %s275
          %s277 = sshll.u32 %s269, 4
          %s278 = int_to_ptr.vmem [resolvable:$true] %s277
          %283 = dma.hbm_to_vmem [thread:$0]  %s276, 512, %s278, %s266, 64, 64, 4
        $region32: #{tpu_custom_call.1} parent=23 // pred_fallthru
          _
      $region24: #{tpu_custom_call.1} parent=5 // pred_fallthru
        _
      %p284 = scmp.le.s32.totalorder 1, %s26
      %p285 = scmp.lt.s32.totalorder %s26, 3
      %p286 = pnand %p284, %p285
      %p287 = pneg %p286
      // Predicated region
      $region33: #{tpu_custom_call.1} parent=5 // pred_check
        _
      $region34: #{tpu_custom_call.1} parent=5 // pred_check_branch
        %289 = sbr.rel (%p286) target = $region36
      $region35: #{tpu_custom_call.1} parent=5 // pred_region
        %s290 = ssub.s32 %s26, 1
        %s291 = sand.u32 %s39, 1
        %s292 = scalar_lea.sflag [#allocation3], %s291
        %s293 = sand.u32 %s39, 1
        %s294 = smul.addr %s293, 32
        %s295 = scalar_lea.vmem [#allocation2], %s294
        // Predicated region
        $region37: #{tpu_custom_call.1} parent=35 // pred_check
          %p296 = pneg %p52
        $region38: #{tpu_custom_call.1} parent=35 // pred_check_branch
          %298 = sbr.rel (%p296) target = $region40
        $region39: #{tpu_custom_call.1} parent=35 // pred_region
          %300 = dma.done %s292, 512
        $region40: #{tpu_custom_call.1} parent=35 // pred_fallthru
          _
        %s301 = sand.u32 %s31, 1
        %s302 = scalar_lea.sflag [#allocation6], %s301
        %s303 = sand.u32 %s65, 1
        %s304 = smul.addr %s303, 32
        %s305 = scalar_lea.vmem [#allocation5], %s304
        // Predicated region
        $region41: #{tpu_custom_call.1} parent=35 // pred_check
          %p306 = pneg %p78
        $region42: #{tpu_custom_call.1} parent=35 // pred_check_branch
          %308 = sbr.rel (%p306) target = $region44
        $region43: #{tpu_custom_call.1} parent=35 // pred_region
          %310 = dma.done %s302, 512
        $region44: #{tpu_custom_call.1} parent=35 // pred_fallthru
          _
        // Predicated region
        $region45: #{tpu_custom_call.1} parent=35 // pred_check
          %p311 = pneg %p99
        $region46: #{tpu_custom_call.1} parent=35 // pred_check_branch
          %313 = sbr.rel (%p311) target = $region48
        $region47: #{tpu_custom_call.1} parent=35 // pred_region
          %315 = dma.done [#allocation6], 1024
        $region48: #{tpu_custom_call.1} parent=35 // pred_fallthru
          _
        // Predicated region
        $region49: #{tpu_custom_call.1} parent=35 // pred_check
          %p316 = pneg %p120
        $region50: #{tpu_custom_call.1} parent=35 // pred_check_branch
          %318 = sbr.rel (%p316) target = $region52
        $region51: #{tpu_custom_call.1} parent=35 // pred_region
          %320 = dma.done [#allocation9], 1024
        $region52: #{tpu_custom_call.1} parent=35 // pred_fallthru
          _
        %s321 = sand.u32 %s39, 1
        %s322 = scalar_lea.sflag [#allocation3], %s321
        %s323 = sand.u32 %s39, 1
        %s324 = smul.addr %s323, 32
        %s325 = scalar_lea.vmem [#allocation2], %s324
        %p326 = pneg %p52
        %p327 = pneg %p49
        %s328 = sand.u32 %s31, 1
        %s329 = scalar_lea.sflag [#allocation6], %s328
        %s330 = sand.u32 %s65, 1
        %s331 = smul.addr %s330, 32
        %s332 = scalar_lea.vmem [#allocation5], %s331
        %p333 = pneg %p78
        %p334 = pneg %p75
        %p335 = pneg %p99
        %p336 = pneg %p96
        %p337 = pneg %p120
        %p338 = pneg %p117
        %p339 = pneg %p146
        %p340 = pneg %p143
        %s341 = sand.u32 %s133, 1
        %s342 = scalar_lea.sflag [#allocation4], %s341
        %s343 = sand.u32 %s133, 1
        %s344 = smul.addr %s343, 32
        %s345 = scalar_lea.vmem [#allocation10], %s344
        %p346 = pneg %p172
        %p347 = pneg %p169
        %s348 = sand.u32 %s31, 1
        %s349 = scalar_lea.sflag [#allocation12], %s348
        %s350 = sand.u32 %s159, 1
        %s351 = smul.addr %s350, 32
        %s352 = scalar_lea.vmem [#allocation11], %s351
        %p353 = pneg %p193
        %p354 = pneg %p190
        %s355 = smul.u32 8, %s31
        %s356 = smul.u32 8, %s31
        %s357 = smul.u32 8, %s31
        %s358 = smul.u32 8, %s31
        %v359 = vld [vmem:[%s295] sm:$0xf]
        %v360 = vld [vmem:[%s295 + $0x4] sm:$0xf]
        %v361 = vld [vmem:[%s295 + $0x8] sm:$0xf]
        %v362 = vld [vmem:[%s295 + $0xc] sm:$0xf]
        %v363 = vld [vmem:[%s295 + $0x10] sm:$0xf]
        %v364 = vld [vmem:[%s295 + $0x14] sm:$0xf]
        %v365 = vld [vmem:[%s295 + $0x18] sm:$0xf]
        %v366 = vld [vmem:[%s295 + $0x1c] sm:$0xf]
        %v367 = vld [vmem:[#allocation7] sm:$0xf]
        %v368 = vld [vmem:[#allocation7 + $0x4] sm:$0xf]
        %v369 = vld [vmem:[#allocation7 + $0x8] sm:$0xf]
        %v370 = vld [vmem:[#allocation7 + $0xc] sm:$0xf]
        %v371 = vld [vmem:[#allocation7 + $0x10] sm:$0xf]
        %v372 = vld [vmem:[#allocation7 + $0x14] sm:$0xf]
        %v373 = vld [vmem:[#allocation7 + $0x18] sm:$0xf]
        %v374 = vld [vmem:[#allocation7 + $0x1c] sm:$0xf]
        %v375 = vld [vmem:[#allocation7 + $0x20] sm:$0xf]
        %v376 = vld [vmem:[#allocation7 + $0x24] sm:$0xf]
        %v377 = vld [vmem:[#allocation7 + $0x28] sm:$0xf]
        %v378 = vld [vmem:[#allocation7 + $0x2c] sm:$0xf]
        %v379 = vld [vmem:[#allocation7 + $0x30] sm:$0xf]
        %v380 = vld [vmem:[#allocation7 + $0x34] sm:$0xf]
        %v381 = vld [vmem:[#allocation7 + $0x38] sm:$0xf]
        %v382 = vld [vmem:[#allocation7 + $0x3c] sm:$0xf]
        %v391 = vunpack.c.l.b16 %v359
        %v392 = vunpack.c.l.b16 %v360
        %v393 = vunpack.c.l.b16 %v361
        %v394 = vunpack.c.l.b16 %v362
        %v395 = vunpack.c.l.b16 %v363
        %v396 = vunpack.c.l.b16 %v364
        %v397 = vunpack.c.l.b16 %v365
        %v398 = vunpack.c.l.b16 %v366
        %v399 = vpack.c.b16 %v392, %v391
        %v400 = vpack.c.b16 %v394, %v393
        %v401 = vpack.c.b16 %v396, %v395
        %v402 = vpack.c.b16 %v398, %v397
        %v423 = vunpack.c.l.b16 %v367
        %v424 = vunpack.c.l.b16 %v368
        %v425 = vunpack.c.l.b16 %v369
        %v426 = vunpack.c.l.b16 %v370
        %v427 = vunpack.c.l.b16 %v371
        %v428 = vunpack.c.l.b16 %v372
        %v429 = vunpack.c.l.b16 %v373
        %v430 = vunpack.c.l.b16 %v374
        %v431 = vunpack.c.l.b16 %v375
        %v432 = vunpack.c.l.b16 %v376
        %v433 = vunpack.c.l.b16 %v377
        %v434 = vunpack.c.l.b16 %v378
        %v435 = vunpack.c.l.b16 %v379
        %v436 = vunpack.c.l.b16 %v380
        %v437 = vunpack.c.l.b16 %v381
        %v438 = vunpack.c.l.b16 %v382
        %v439 = vpack.c.b16 %v424, %v423
        %v440 = vpack.c.b16 %v426, %v425
        %v441 = vpack.c.b16 %v428, %v427
        %v442 = vpack.c.b16 %v430, %v429
        %v443 = vpack.c.b16 %v432, %v431
        %v444 = vpack.c.b16 %v434, %v433
        %v445 = vpack.c.b16 %v436, %v435
        %v446 = vpack.c.b16 %v438, %v437
        %455 = vmatpush.bf16.msra.mxu0 %v446
        %456 = vmatpush.bf16.msra.mxu0 %v445
        %457 = vmatpush.bf16.msra.mxu0 %v444
        %458 = vmatpush.bf16.msra.mxu0 %v443
        %459 = vmatpush.bf16.msra.mxu0 %v442
        %460 = vmatpush.bf16.msra.mxu0 %v441
        %461 = vmatpush.bf16.msra.mxu0 %v440
        %462 = vmatpush.bf16.msra.mxu0 %v439
        %463 = vmatmul.bf16.gmra.mxu0 %v399
        %v464 = vpop.f32.mrf.mxu0
        %v465 = vadd.f32 0.0, %v464
        %v466 = vpop.f32.mrf.mxu0
        %v467 = vadd.f32 0.0, %v466
        %468 = vmatmul.bf16.gmra.mxu0 %v400
        %v469 = vpop.f32.mrf.mxu0
        %v470 = vadd.f32 0.0, %v469
        %v471 = vpop.f32.mrf.mxu0
        %v472 = vadd.f32 0.0, %v471
        %473 = vmatmul.bf16.gmra.mxu0 %v401
        %v474 = vpop.f32.mrf.mxu0
        %v475 = vadd.f32 0.0, %v474
        %v476 = vpop.f32.mrf.mxu0
        %v477 = vadd.f32 0.0, %v476
        %478 = vmatmul.bf16.gmra.mxu0 %v402
        %v479 = vpop.f32.mrf.mxu0
        %v480 = vadd.f32 0.0, %v479
        %v481 = vpop.f32.mrf.mxu0
        %v482 = vadd.f32 0.0, %v481
        %483 = vdwg.mxu0
        %v484 = vld [vmem:[%s305] sm:$0xf]
        %v485 = vld [vmem:[%s305 + $0x4] sm:$0xf]
        %v486 = vld [vmem:[%s305 + $0x8] sm:$0xf]
        %v487 = vld [vmem:[%s305 + $0xc] sm:$0xf]
        %v488 = vld [vmem:[%s305 + $0x10] sm:$0xf]
        %v489 = vld [vmem:[%s305 + $0x14] sm:$0xf]
        %v490 = vld [vmem:[%s305 + $0x18] sm:$0xf]
        %v491 = vld [vmem:[%s305 + $0x1c] sm:$0xf]
        %v492 = vld [vmem:[#allocation8] sm:$0xf]
        %v493 = vld [vmem:[#allocation8 + $0x4] sm:$0xf]
        %v494 = vld [vmem:[#allocation8 + $0x8] sm:$0xf]
        %v495 = vld [vmem:[#allocation8 + $0xc] sm:$0xf]
        %v496 = vld [vmem:[#allocation8 + $0x10] sm:$0xf]
        %v497 = vld [vmem:[#allocation8 + $0x14] sm:$0xf]
        %v498 = vld [vmem:[#allocation8 + $0x18] sm:$0xf]
        %v499 = vld [vmem:[#allocation8 + $0x1c] sm:$0xf]
        %v500 = vld [vmem:[#allocation8 + $0x20] sm:$0xf]
        %v501 = vld [vmem:[#allocation8 + $0x24] sm:$0xf]
        %v502 = vld [vmem:[#allocation8 + $0x28] sm:$0xf]
        %v503 = vld [vmem:[#allocation8 + $0x2c] sm:$0xf]
        %v504 = vld [vmem:[#allocation8 + $0x30] sm:$0xf]
        %v505 = vld [vmem:[#allocation8 + $0x34] sm:$0xf]
        %v506 = vld [vmem:[#allocation8 + $0x38] sm:$0xf]
        %v507 = vld [vmem:[#allocation8 + $0x3c] sm:$0xf]
        %v516 = vunpack.c.l.b16 %v484
        %v517 = vunpack.c.l.b16 %v485
        %v518 = vunpack.c.l.b16 %v486
        %v519 = vunpack.c.l.b16 %v487
        %v520 = vunpack.c.l.b16 %v488
        %v521 = vunpack.c.l.b16 %v489
        %v522 = vunpack.c.l.b16 %v490
        %v523 = vunpack.c.l.b16 %v491
        %v524 = vpack.c.b16 %v517, %v516
        %v525 = vpack.c.b16 %v519, %v518
        %v526 = vpack.c.b16 %v521, %v520
        %v527 = vpack.c.b16 %v523, %v522
        %v548 = vunpack.c.l.b16 %v492
        %v549 = vunpack.c.l.b16 %v493
        %v550 = vunpack.c.l.b16 %v494
        %v551 = vunpack.c.l.b16 %v495
        %v552 = vunpack.c.l.b16 %v496
        %v553 = vunpack.c.l.b16 %v497
        %v554 = vunpack.c.l.b16 %v498
        %v555 = vunpack.c.l.b16 %v499
        %v556 = vunpack.c.l.b16 %v500
        %v557 = vunpack.c.l.b16 %v501
        %v558 = vunpack.c.l.b16 %v502
        %v559 = vunpack.c.l.b16 %v503
        %v560 = vunpack.c.l.b16 %v504
        %v561 = vunpack.c.l.b16 %v505
        %v562 = vunpack.c.l.b16 %v506
        %v563 = vunpack.c.l.b16 %v507
        %v564 = vpack.c.b16 %v549, %v548
        %v565 = vpack.c.b16 %v551, %v550
        %v566 = vpack.c.b16 %v553, %v552
        %v567 = vpack.c.b16 %v555, %v554
        %v568 = vpack.c.b16 %v557, %v556
        %v569 = vpack.c.b16 %v559, %v558
        %v570 = vpack.c.b16 %v561, %v560
        %v571 = vpack.c.b16 %v563, %v562
        %580 = vmatpush.bf16.msra.mxu0 %v571
        %581 = vmatpush.bf16.msra.mxu0 %v570
        %582 = vmatpush.bf16.msra.mxu0 %v569
        %583 = vmatpush.bf16.msra.mxu0 %v568
        %584 = vmatpush.bf16.msra.mxu0 %v567
        %585 = vmatpush.bf16.msra.mxu0 %v566
        %586 = vmatpush.bf16.msra.mxu0 %v565
        %587 = vmatpush.bf16.msra.mxu0 %v564
        %588 = vmatmul.bf16.gmra.mxu0 %v524
        %v589 = vpop.f32.mrf.mxu0
        %v590 = vadd.f32 0.0, %v589
        %v591 = vpop.f32.mrf.mxu0
        %v592 = vadd.f32 0.0, %v591
        %593 = vmatmul.bf16.gmra.mxu0 %v525
        %v594 = vpop.f32.mrf.mxu0
        %v595 = vadd.f32 0.0, %v594
        %v596 = vpop.f32.mrf.mxu0
        %v597 = vadd.f32 0.0, %v596
        %598 = vmatmul.bf16.gmra.mxu0 %v526
        %v599 = vpop.f32.mrf.mxu0
        %v600 = vadd.f32 0.0, %v599
        %v601 = vpop.f32.mrf.mxu0
        %v602 = vadd.f32 0.0, %v601
        %603 = vmatmul.bf16.gmra.mxu0 %v527
        %v604 = vpop.f32.mrf.mxu0
        %v605 = vadd.f32 0.0, %v604
        %v606 = vpop.f32.mrf.mxu0
        %v607 = vadd.f32 0.0, %v606
        %608 = vdwg.mxu0
        %v609 = vpack.c.bf16 %v465, %v465
        %v610 = vpack.c.bf16 %v467, %v467
        %v611 = vpack.c.bf16 %v470, %v470
        %v612 = vpack.c.bf16 %v472, %v472
        %v613 = vpack.c.bf16 %v475, %v475
        %v614 = vpack.c.bf16 %v477, %v477
        %v615 = vpack.c.bf16 %v480, %v480
        %v616 = vpack.c.bf16 %v482, %v482
        %617 = vst [vmem:[%s345] sm:$0xf] %v609
        %618 = vst [vmem:[%s345 + $0x4] sm:$0xf] %v610
        %619 = vst [vmem:[%s345 + $0x8] sm:$0xf] %v611
        %620 = vst [vmem:[%s345 + $0xc] sm:$0xf] %v612
        %621 = vst [vmem:[%s345 + $0x10] sm:$0xf] %v613
        %622 = vst [vmem:[%s345 + $0x14] sm:$0xf] %v614
        %623 = vst [vmem:[%s345 + $0x18] sm:$0xf] %v615
        %624 = vst [vmem:[%s345 + $0x1c] sm:$0xf] %v616
        %v625 = vpack.c.bf16 %v590, %v590
        %v626 = vpack.c.bf16 %v592, %v592
        %v627 = vpack.c.bf16 %v595, %v595
        %v628 = vpack.c.bf16 %v597, %v597
        %v629 = vpack.c.bf16 %v600, %v600
        %v630 = vpack.c.bf16 %v602, %v602
        %v631 = vpack.c.bf16 %v605, %v605
        %v632 = vpack.c.bf16 %v607, %v607
        %633 = vst [vmem:[%s352] sm:$0xf] %v625
        %634 = vst [vmem:[%s352 + $0x4] sm:$0xf] %v626
        %635 = vst [vmem:[%s352 + $0x8] sm:$0xf] %v627
        %636 = vst [vmem:[%s352 + $0xc] sm:$0xf] %v628
        %637 = vst [vmem:[%s352 + $0x10] sm:$0xf] %v629
        %638 = vst [vmem:[%s352 + $0x14] sm:$0xf] %v630
        %639 = vst [vmem:[%s352 + $0x18] sm:$0xf] %v631
        %640 = vst [vmem:[%s352 + $0x1c] sm:$0xf] %v632
        %v641 = vadd.f32 %v465, %v467
        %v642 = vadd.f32 %v641, %v470
        %v643 = vadd.f32 %v642, %v472
        %v644 = vadd.f32 %v643, %v475
        %v645 = vadd.f32 %v644, %v477
        %v646 = vadd.f32 %v645, %v480
        %v647 = vadd.f32 %v646, %v482
        %v648 = vrot.slane %v647, 4
        %v649 = vadd.f32 %v647, %v648
        %v650 = vrot.slane %v649, 2
        %v651 = vadd.f32 %v649, %v650
        %v652 = vrot.slane %v651, 1
        %v653 = vadd.f32 %v651, %v652
        %v654 = vmul.f32 %v465, %v465
        %v655 = vmul.f32 %v467, %v467
        %v656 = vmul.f32 %v470, %v470
        %v657 = vmul.f32 %v472, %v472
        %v658 = vmul.f32 %v475, %v475
        %v659 = vmul.f32 %v477, %v477
        %v660 = vmul.f32 %v480, %v480
        %v661 = vmul.f32 %v482, %v482
        %v662 = vadd.f32 %v654, %v655
        %v663 = vadd.f32 %v662, %v656
        %v664 = vadd.f32 %v663, %v657
        %v665 = vadd.f32 %v664, %v658
        %v666 = vadd.f32 %v665, %v659
        %v667 = vadd.f32 %v666, %v660
        %v668 = vadd.f32 %v667, %v661
        %v669 = vrot.slane %v668, 4
        %v670 = vadd.f32 %v668, %v669
        %v671 = vrot.slane %v670, 2
        %v672 = vadd.f32 %v670, %v671
        %v673 = vrot.slane %v672, 1
        %v674 = vadd.f32 %v672, %v673
        %v675 = vadd.f32 %v590, %v592
        %v676 = vadd.f32 %v675, %v595
        %v677 = vadd.f32 %v676, %v597
        %v678 = vadd.f32 %v677, %v600
        %v679 = vadd.f32 %v678, %v602
        %v680 = vadd.f32 %v679, %v605
        %v681 = vadd.f32 %v680, %v607
        %v682 = vrot.slane %v681, 4
        %v683 = vadd.f32 %v681, %v682
        %v684 = vrot.slane %v683, 2
        %v685 = vadd.f32 %v683, %v684
        %v686 = vrot.slane %v685, 1
        %v687 = vadd.f32 %v685, %v686
        %v688 = vmul.f32 %v590, %v590
        %v689 = vmul.f32 %v592, %v592
        %v690 = vmul.f32 %v595, %v595
        %v691 = vmul.f32 %v597, %v597
        %v692 = vmul.f32 %v600, %v600
        %v693 = vmul.f32 %v602, %v602
        %v694 = vmul.f32 %v605, %v605
        %v695 = vmul.f32 %v607, %v607
        %v696 = vadd.f32 %v688, %v689
        %v697 = vadd.f32 %v696, %v690
        %v698 = vadd.f32 %v697, %v691
        %v699 = vadd.f32 %v698, %v692
        %v700 = vadd.f32 %v699, %v693
        %v701 = vadd.f32 %v700, %v694
        %v702 = vadd.f32 %v701, %v695
        %v703 = vrot.slane %v702, 4
        %v704 = vadd.f32 %v702, %v703
        %v705 = vrot.slane %v704, 2
        %v706 = vadd.f32 %v704, %v705
        %v707 = vrot.slane %v706, 1
        %v708 = vadd.f32 %v706, %v707
        %vm709 = vcmask 1040384
        %v710 = vsel %vm709, %v653, %v674
        %vm711 = vcmask 1041408
        %v712 = vsel %vm711, %v710, %v687
        %vm713 = vcmask 1042432
        %v714 = vsel %vm713, %v712, %v708
        %vm715 = vcmask 1043456
        %v716 = vsel %vm715, %v714, 0.0
        %p717 = scmp.eq.s32.totalorder %s31, 0
        // Predicated region
        $region53: #{tpu_custom_call.1} parent=35 // pred_check
          %p718 = pneg %p717
        $region54: #{tpu_custom_call.1} parent=35 // pred_check_branch
          %720 = sbr.rel (%p718) target = $region56
        $region55: #{tpu_custom_call.1} parent=35 // pred_region
          %721 = vst [vmem:[#allocation13] sm:$0xff] 0.0
        $region56: #{tpu_custom_call.1} parent=35 // pred_fallthru
          _
        %v722 = vld [vmem:[#allocation13] sm:$0xff]
        %v723 = vadd.f32 %v722, %v716
        %724 = vst [vmem:[#allocation13] sm:$0xff] %v723
        %s725 = sand.u32 %s133, 1
        %s726 = scalar_lea.sflag [#allocation4], %s725
        %s727 = sand.u32 %s133, 1
        %s728 = smul.addr %s727, 32
        %s729 = scalar_lea.vmem [#allocation10], %s728
        %s730 = sand.u32 %s31, 1
        %s731 = scalar_lea.sflag [#allocation12], %s730
        %s732 = sand.u32 %s159, 1
        %s733 = smul.addr %s732, 32
        %s734 = scalar_lea.vmem [#allocation11], %s733
        // Predicated region
        $region57: #{tpu_custom_call.1} parent=35 // pred_check
          %p735 = pneg %p143
        $region58: #{tpu_custom_call.1} parent=35 // pred_check_branch
          %737 = sbr.rel (%p735) target = $region60
        $region59: #{tpu_custom_call.1} parent=35 // pred_region
          %s738 = smul.u32 8, %s31
          %740 = vsyncadd %s726, 0
          %s741 = smul.addr %s738, 4
          %s742 = scalar_lea.hbm %s4, %s741
          %s743 = sshll.u32 %s729, 4
          %s744 = int_to_ptr.vmem [resolvable:$true] %s743
          %s745 = sshll.u32 %s742, 4
          %s746 = int_to_ptr.hbm [resolvable:$true] %s745
          %751 = dma.vmem_to_hbm [thread:$0]  %s744, 512, %s746, %s726, 64, 64, 4
        $region60: #{tpu_custom_call.1} parent=35 // pred_fallthru
          _
        // Predicated region
        $region61: #{tpu_custom_call.1} parent=35 // pred_check
          %p752 = pneg %p169
        $region62: #{tpu_custom_call.1} parent=35 // pred_check_branch
          %754 = sbr.rel (%p752) target = $region64
        $region63: #{tpu_custom_call.1} parent=35 // pred_region
          %s755 = smul.u32 8, %s31
          %757 = vsyncadd %s731, 0
          %s758 = smul.addr %s755, 4
          %s759 = scalar_lea.hbm %s5, %s758
          %s760 = sshll.u32 %s734, 4
          %s761 = int_to_ptr.vmem [resolvable:$true] %s760
          %s762 = sshll.u32 %s759, 4
          %s763 = int_to_ptr.hbm [resolvable:$true] %s762
          %768 = dma.vmem_to_hbm [thread:$0]  %s761, 512, %s763, %s731, 64, 64, 4
        $region64: #{tpu_custom_call.1} parent=35 // pred_fallthru
          _
        // Predicated region
        $region65: #{tpu_custom_call.1} parent=35 // pred_check
          %p769 = pneg %p190
        $region66: #{tpu_custom_call.1} parent=35 // pred_check_branch
          %771 = sbr.rel (%p769) target = $region68
        $region67: #{tpu_custom_call.1} parent=35 // pred_region
          %773 = vsyncadd [#allocation12], 0
          %s775 = sshll.u32 [#allocation13], 4
          %s776 = int_to_ptr.vmem [resolvable:$true] %s775
          %s777 = sshll.u32 %s6, 4
          %s778 = int_to_ptr.hbm [resolvable:$true] %s777
          %780 = dma.vmem_to_hbm [thread:$0]  %s776, 128, %s778, [#allocation12]
        $region68: #{tpu_custom_call.1} parent=35 // pred_fallthru
          _
        // Predicated region
        $region69: #{tpu_custom_call.1} parent=35 // pred_check
          %p781 = pneg %p190
        $region70: #{tpu_custom_call.1} parent=35 // pred_check_branch
          %783 = sbr.rel (%p781) target = $region72
        $region71: #{tpu_custom_call.1} parent=35 // pred_region
          %785 = dma.done [#allocation12], 128
        $region72: #{tpu_custom_call.1} parent=35 // pred_fallthru
          _
      $region36: #{tpu_custom_call.1} parent=5 // pred_fallthru
        _
      %p786 = scmp.le.s32.totalorder 2, %s26
      // Predicated region
      $region73: #{tpu_custom_call.1} parent=5 // pred_check
        %p787 = pneg %p786
      $region74: #{tpu_custom_call.1} parent=5 // pred_check_branch
        %789 = sbr.rel (%p787) target = $region76
      $region75: #{tpu_custom_call.1} parent=5 // pred_region
        %s790 = ssub.s32 %s26, 2
        // Predicated region
        $region77: #{tpu_custom_call.1} parent=75 // pred_check
          %p791 = pneg %p149
        $region78: #{tpu_custom_call.1} parent=75 // pred_check_branch
          %793 = sbr.rel (%p791) target = $region80
        $region79: #{tpu_custom_call.1} parent=75 // pred_region
          %s794 = sand.u32 %s134, 1
          %s795 = scalar_lea.sflag [#allocation4], %s794
          %s796 = sand.u32 %s134, 1
          %s797 = smul.addr %s796, 32
          %s798 = scalar_lea.vmem [#allocation10], %s797
          %800 = dma.done %s795, 512
        $region80: #{tpu_custom_call.1} parent=75 // pred_fallthru
          _
        // Predicated region
        $region81: #{tpu_custom_call.1} parent=75 // pred_check
          %p801 = pneg %p175
        $region82: #{tpu_custom_call.1} parent=75 // pred_check_branch
          %803 = sbr.rel (%p801) target = $region84
        $region83: #{tpu_custom_call.1} parent=75 // pred_region
          %s804 = sand.u32 %s32, 1
          %s805 = scalar_lea.sflag [#allocation12], %s804
          %s806 = sand.u32 %s160, 1
          %s807 = smul.addr %s806, 32
          %s808 = scalar_lea.vmem [#allocation11], %s807
          %810 = dma.done %s805, 512
        $region84: #{tpu_custom_call.1} parent=75 // pred_fallthru
          _
      $region76: #{tpu_custom_call.1} parent=5 // pred_fallthru
        _
    $region6: #{tpu_custom_call.1} parent=1 // loop_footer
      %s30 = sadd.s32 1, %s26
    $region7: #{tpu_custom_call.1} parent=1 // loop_footer_branch
      %25 = sbr.rel target = $region3
    $region8: #{tpu_custom_call.1} parent=1 // loop_exit
      _
    %811 = vsyncpa [#allocation3], 1
    %s812 = scalar_lea.sflag [#allocation3], 1
    %813 = vsyncpa %s812, 1
    %814 = vsyncpa [#allocation6], 1
    %s815 = scalar_lea.sflag [#allocation6], 1
    %816 = vsyncpa %s815, 1
    %817 = vsyncpa [#allocation9], 1
    %818 = vsyncpa [#allocation4], 1
    %s819 = scalar_lea.sflag [#allocation4], 1
    %820 = vsyncpa %s819, 1
    %821 = vsyncpa [#allocation12], 1
    %s822 = scalar_lea.sflag [#allocation12], 1
    %823 = vsyncpa %s822, 1

</llo_original>
